<compile_context>
chip_gen: v5e
topology: v5e:2x2
jax: 0.10.0
libtpu: 0.0.40
codegen_flags: <defaults>
</compile_context>

<pallas_src>
import functools

import jax
import jax.numpy as jnp
from jax.experimental import pallas as pl
from jax.experimental.pallas import tpu as pltpu


def _round_up(x, m):
    return ((x + m - 1) // m) * m


# ------------------------------ supports ------------------------------------ #

def random_walk_matrix(adj):
    d = jnp.sum(adj, axis=1)
    d_inv = jnp.where(d > 0, 1.0 / d, 0.0)
    return d_inv[:, None] * adj                      # D^-1 W


def build_supports(adj, filter_type="dual_random_walk"):
    if filter_type == "random_walk":
        return [random_walk_matrix(adj).T]
    # dual_random_walk (default here)
    return [random_walk_matrix(adj).T, random_walk_matrix(adj.T).T]


def prepare_supports(supports, n_pad):
    """Pad supports to (num_supports, N_p, N_p) and cast to bf16 once."""
    mats = []
    for S in supports:
        n = S.shape[0]
        mats.append(jnp.pad(S.astype(jnp.float32),
                            ((0, n_pad - n), (0, n_pad - n))))
    return jnp.stack(mats).astype(jnp.bfloat16)


# ----------------------- parameters (ref format + prep) --------------------- #

def init_encoder_params(key, num_rnn_layers, input_dim, rnn_units, num_matrices):
    """Reference-format parameters, matching DCGRUCell's (F*M, out) weights."""
    params = []
    for layer in range(num_rnn_layers):
        in_dim = input_dim if layer == 0 else rnn_units
        input_size = in_dim + rnn_units
        key, k1, k2 = jax.random.split(key, 3)
        params.append(dict(
            W_gate=0.1 * jax.random.normal(
                k1, (input_size * num_matrices, 2 * rnn_units), jnp.float32),
            b_gate=jnp.ones((2 * rnn_units,), jnp.float32),   # bias_start = 1.0
            W_cand=0.1 * jax.random.normal(
                k2, (input_size * num_matrices, rnn_units), jnp.float32),
            b_cand=jnp.zeros((rnn_units,), jnp.float32),       # bias_start = 0.0
        ))
    return params


def prepare_encoder_params(params, input_dim, rnn_units, num_matrices):
    """One-time prep: per layer, split the (F*M, out) weights (rows indexed
    f*M + m) per diffusion matrix, fuse [gate_r | gate_u | cand_x] into one
    (F_p, 3G) slab, pad sublane dims to multiples of 16 and cast to bf16."""
    U = rnn_units
    M = num_matrices
    G = _round_up(U, 16)                     # padded unit width (one column group)
    Xp = _round_up(max(input_dim, U), 16)    # padded x-feature width (all layers)
    Fp = Xp + G
    wf_l, whc_l, bias_l = [], [], []
    for layer, p in enumerate(params):
        in_dim = input_dim if layer == 0 else U
        F = in_dim + U
        Wg = p["W_gate"].reshape(F, M, 2 * U).transpose(1, 0, 2)   # (M, F, 2U)
        Wc = p["W_cand"].reshape(F, M, U).transpose(1, 0, 2)       # (M, F, U)
        wf = jnp.zeros((M, Fp, 3 * G), jnp.float32)
        # x rows: gate-r | gate-u | cand-x
        wf = wf.at[:, :in_dim, 0:U].set(Wg[:, :in_dim, :U])
        wf = wf.at[:, :in_dim, G:G + U].set(Wg[:, :in_dim, U:])
        wf = wf.at[:, :in_dim, 2 * G:2 * G + U].set(Wc[:, :in_dim, :])
        # h rows: gates only (the candidate h-part is applied to r*h in phase 2)
        wf = wf.at[:, Xp:Xp + U, 0:U].set(Wg[:, in_dim:, :U])
        wf = wf.at[:, Xp:Xp + U, G:G + U].set(Wg[:, in_dim:, U:])
        whc = jnp.zeros((M, G, G), jnp.float32).at[:, :U, :U].set(Wc[:, in_dim:, :])
        bias = jnp.zeros((1, 3 * G), jnp.float32)
        bias = bias.at[0, 0:U].set(p["b_gate"][:U])
        bias = bias.at[0, G:G + U].set(p["b_gate"][U:])
        bias = bias.at[0, 2 * G:2 * G + U].set(p["b_cand"])
        wf_l.append(wf)
        whc_l.append(whc)
        bias_l.append(bias)
    prepped = dict(
        wf=jnp.stack(wf_l).astype(jnp.bfloat16),      # (L, M, Fp, 3G)
        whc=jnp.stack(whc_l).astype(jnp.bfloat16),    # (L, M, G, G)
        bias=jnp.stack(bias_l).astype(jnp.float32),   # (L, 1, 3G)
    )
    dims = dict(G=G, Xp=Xp, Fp=Fp)
    return prepped, dims


# --------------------------- fused DCGRU-stack kernel ----------------------- #

def _dcgru_stack_kernel(x_ref, h_ref, s_ref, wf_ref, whc_ref, b_ref,
                        out_ref, z_ref, prevh_ref, *,
                        num_supports, max_diffusion_step, group, xpad):
    """One (batch, layer) grid step of the DCGRU stack:
    gate gconv -> (r, u) -> r*h -> candidate gconv -> GRU blend, fully fused."""
    f32, bf16 = jnp.float32, jnp.bfloat16
    G = group
    layer = pl.program_id(1)

    def mm(a, b):                            # bf16 MXU matmul, f32 accumulation
        return jnp.dot(a.astype(bf16), b.astype(bf16),
                       preferred_element_type=f32)

    h32 = h_ref[0, 0].astype(f32)            # (N_p, G) initial hidden of this layer

    # ---- assemble z = [x | h] in VMEM.  x is the encoder input for layer 0 and the
    #      previous layer's output (bf16, VMEM-resident scratch) otherwise. ----
    @pl.when(layer == 0)
    def _():
        z_ref[:, 0:xpad] = x_ref[0]

    @pl.when(layer != 0)
    def _():
        xprev = prevh_ref[...]
        if xpad > G:
            xprev = jnp.pad(xprev, ((0, 0), (0, xpad - G)))
        z_ref[:, 0:xpad] = xprev

    z_ref[:, xpad:] = h32.astype(bf16)
    z = z_ref[...]                           # (N_p, Fp) bf16

    # ---- phase 1: Chebyshev diffusion of z, fused [gate_r | gate_u | cand_x] weights ----
    acc = mm(z, wf_ref[0, 0])                # (N_p, 3G) f32
    m = 1
    if max_diffusion_step > 0:
        z32 = z.astype(f32)
        for s in range(num_supports):
            S = s_ref[s]                     # (N_p, N_p) bf16, VMEM-resident
            t1 = mm(S, z)                    # f32 Chebyshev carry
            acc = acc + mm(t1, wf_ref[0, m]); m += 1
            tk1, tk2 = t1, z32
            for _ in range(2, max_diffusion_step + 1):
                t2 = 2.0 * mm(S, tk1) - tk2
                acc = acc + mm(t2, wf_ref[0, m]); m += 1
                tk1, tk2 = t2, tk1

    pre = acc + b_ref[0]                     # + [b_r | b_u | b_c]
    r = jax.nn.sigmoid(pre[:, 0:G])
    u = jax.nn.sigmoid(pre[:, G:2 * G])
    cand = pre[:, 2 * G:]                    # candidate x-part (+ candidate bias)
    rh = r * h32                             # fused r*h epilogue (f32)

    # ---- phase 2: Chebyshev diffusion of r*h, candidate h-part weights ----
    cand = cand + mm(rh, whc_ref[0, 0])
    m = 1
    if max_diffusion_step > 0:
        for s in range(num_supports):
            S = s_ref[s]
            t1 = mm(S, rh)
            cand = cand + mm(t1, whc_ref[0, m]); m += 1
            tk1, tk2 = t1, rh
            for _ in range(2, max_diffusion_step + 1):
                t2 = 2.0 * mm(S, tk1) - tk2
                cand = cand + mm(t2, whc_ref[0, m]); m += 1
                tk1, tk2 = t2, tk1

    c = jnp.tanh(cand)
    new_h = u * h32 + (1.0 - u) * c          # GRU blend (f32)
    out_ref[0, 0] = new_h.astype(out_ref.dtype)
    prevh_ref[...] = new_h.astype(bf16)      # feeds the next layer, stays in VMEM


# ------------------------------ Encoder model ------------------------------- #

def make_encoder_forward(*, num_nodes, input_dim, rnn_units, num_rnn_layers,
                         max_diffusion_step, num_supports, dims):
    U = rnn_units
    G, Xp, Fp = dims["G"], dims["Xp"], dims["Fp"]
    N_p = _round_up(num_nodes, 16)
    M = num_supports * max_diffusion_step + 1
    L = num_rnn_layers

    kernel = functools.partial(
        _dcgru_stack_kernel,
        num_supports=num_supports,
        max_diffusion_step=max_diffusion_step,
        group=G, xpad=Xp)

    def forward(inputs, hidden_state, supports_p, wf, whc, bias):
        B = inputs.shape[0]
        # pad once, outside the recurrent hot path
        x = inputs.reshape(B, num_nodes, input_dim)
        x = jnp.pad(x, ((0, 0), (0, N_p - num_nodes),
                        (0, Xp - input_dim))).astype(jnp.bfloat16)
        h = hidden_state.reshape(L, B, num_nodes, U).astype(jnp.float32)
        h = jnp.pad(h, ((0, 0), (0, 0), (0, N_p - num_nodes), (0, G - U)))

        out = pl.pallas_call(
            kernel,
            out_shape=jax.ShapeDtypeStruct((L, B, N_p, G), jnp.float32),
            grid_spec=pltpu.PrefetchScalarGridSpec(
                num_scalar_prefetch=0,
                grid=(B, L),
                in_specs=[
                    # layer-0 input (constant over the layer axis)
                    pl.BlockSpec((1, N_p, Xp), lambda b, l: (b, 0, 0)),
                    # initial hidden state of layer l, batch b
                    pl.BlockSpec((1, 1, N_p, G), lambda b, l: (l, b, 0, 0)),
                    # supports: constant block index -> DMA'd once, VMEM-resident
                    pl.BlockSpec((num_supports, N_p, N_p), lambda b, l: (0, 0, 0)),
                    # per-layer fused gate/cand-x weights and cand-h weights
                    pl.BlockSpec((1, M, Fp, 3 * G), lambda b, l: (l, 0, 0, 0)),
                    pl.BlockSpec((1, M, G, G), lambda b, l: (l, 0, 0, 0)),
                    pl.BlockSpec((1, 1, 3 * G), lambda b, l: (l, 0, 0)),
                ],
                out_specs=pl.BlockSpec((1, 1, N_p, G), lambda b, l: (l, b, 0, 0)),
                scratch_shapes=[
                    pltpu.VMEM((N_p, Fp), jnp.bfloat16),   # z = [x | h]
                    pltpu.VMEM((N_p, G), jnp.bfloat16),    # previous layer output
                ],
            ),
            compiler_params=pltpu.CompilerParams(
                dimension_semantics=("parallel", "arbitrary"),
                # raised above the 16/32 MiB scoped defaults; stays below v7x's
                # 64 MiB physical VMEM.
                vmem_limit_bytes=48 * 1024 * 1024,
            ),
        )(x, h, supports_p, wf, whc, bias)

        hidden = out[:, :, :num_nodes, :U].reshape(L, B, num_nodes * U)
        return hidden[-1], hidden

    return jax.jit(forward)


# ---------------------- pure-JAX f32 reference (for checking) --------------- #

def _reference_gconv(z_bnF, supports, W, b, out_size, num_nodes, K):
    B, N, F = z_bnF.shape
    x0 = z_bnF.transpose(1, 2, 0).reshape(N, F * B)
    xs = [x0]
    if K > 0:
        for S in supports:
            x1 = S @ x0
            xs.append(x1)
            xk1, xk2 = x1, x0
            for _ in range(2, K + 1):
                x2 = 2.0 * (S @ xk1) - xk2
                xs.append(x2)
                xk1, xk2 = x2, xk1
    M = len(xs)
    xcat = jnp.stack(xs).reshape(M, N, F, B)
    xcat = xcat.transpose(3, 1, 2, 0).reshape(B * N, F * M)
    return (xcat @ W + b).reshape(B, N, out_size)


def encoder_reference(inputs, hidden_state, params, supports,
                      num_nodes, input_dim, rnn_units, max_diffusion_step):
    B = inputs.shape[0]
    U = rnn_units
    out = inputs.reshape(B, num_nodes, input_dim)
    hiddens = []
    for layer, p in enumerate(params):
        h = hidden_state[layer].reshape(B, num_nodes, U)
        z = jnp.concatenate([out, h], axis=2)
        gate = jax.nn.sigmoid(_reference_gconv(
            z, supports, p["W_gate"], p["b_gate"], 2 * U, num_nodes,
            max_diffusion_step))
        r, u = gate[..., :U], gate[..., U:]
        zc = jnp.concatenate([out, r * h], axis=2)
        c = jnp.tanh(_reference_gconv(
            zc, supports, p["W_cand"], p["b_cand"], U, num_nodes,
            max_diffusion_step))
        new_h = u * h + (1.0 - u) * c
        hiddens.append(new_h.reshape(B, num_nodes * U))
        out = new_h
    hidden = jnp.stack(hiddens)
    return hidden[-1], hidden


# ---------------------------------- main ------------------------------------ #

if __name__ == "__main__":
    # Small, deterministic configuration consistent with the module's attrs.
    batch_size = 2
    num_nodes = 8
    input_dim = 2
    rnn_units = 16
    max_diffusion_step = 2
    num_rnn_layers = 2
    filter_type = "dual_random_walk"

    key = jax.random.PRNGKey(0)
    key, k_adj, k_in = jax.random.split(key, 3)

    # Deterministic adjacency (non-negative, with self loops) and inputs.
    adj_mx = jax.random.uniform(k_adj, (num_nodes, num_nodes), jnp.float32)
    adj_mx = adj_mx + jnp.eye(num_nodes, dtype=jnp.float32)
    inputs = jax.random.normal(k_in, (batch_size, num_nodes * input_dim),
                               jnp.float32)

    supports = build_supports(adj_mx, filter_type)
    num_supports = len(supports)
    num_matrices = num_supports * max_diffusion_step + 1

    params = init_encoder_params(key, num_rnn_layers, input_dim, rnn_units,
                                 num_matrices)

    # One-time preparation (hoisted out of the hot path).
    prepped, dims = prepare_encoder_params(params, input_dim, rnn_units,
                                           num_matrices)
    n_pad = _round_up(num_nodes, 16)
    supports_p = prepare_supports(supports, n_pad)

    hidden0 = jnp.zeros((num_rnn_layers, batch_size, num_nodes * rnn_units),
                        jnp.float32)

    forward = make_encoder_forward(
        num_nodes=num_nodes, input_dim=input_dim, rnn_units=rnn_units,
        num_rnn_layers=num_rnn_layers, max_diffusion_step=max_diffusion_step,
        num_supports=num_supports, dims=dims)

    output, hidden = forward(inputs, hidden0, supports_p,
                             prepped["wf"], prepped["whc"], prepped["bias"])
    output = jax.block_until_ready(output)
    hidden = jax.block_until_ready(hidden)

    assert output.shape == (batch_size, num_nodes * rnn_units)
    assert hidden.shape == (num_rnn_layers, batch_size, num_nodes * rnn_units)
    assert bool(jnp.all(jnp.isfinite(output)))
    assert bool(jnp.all(jnp.isfinite(hidden)))

    # Check against a pure-JAX f32 reference of the same DCGRU math.
    ref_out, ref_hidden = encoder_reference(
        inputs, hidden0, params, supports,
        num_nodes, input_dim, rnn_units, max_diffusion_step)
    err = float(jnp.max(jnp.abs(hidden - ref_hidden)))
    assert err < 5e-2, f"max abs err vs f32 reference: {err}"

    print("KERNEL_OK")
</pallas_src>

<mosaic_0001>
module attributes {stable_mosaic.version = 11 : i64} {
  func.func @_dcgru_stack_kernel(%arg0: i32, %arg1: i32, %arg2: memref<1x16x16xbf16, #tpu.memory_space<vmem>>, %arg3: memref<1x1x16x16xf32, #tpu.memory_space<vmem>>, %arg4: memref<2x16x16xbf16, #tpu.memory_space<vmem>>, %arg5: memref<1x5x32x48xbf16, #tpu.memory_space<vmem>>, %arg6: memref<1x5x16x16xbf16, #tpu.memory_space<vmem>>, %arg7: memref<1x1x48xf32, #tpu.memory_space<vmem>>, %arg8: memref<1x1x16x16xf32, #tpu.memory_space<vmem>>, %arg9: memref<16x32xbf16, #tpu.memory_space<vmem>>, %arg10: memref<16x16xbf16, #tpu.memory_space<vmem>>) attributes {dimension_semantics = [#tpu.dimension_semantics<parallel>, #tpu.dimension_semantics<arbitrary>], iteration_bounds = array<i64: 2, 2>, scalar_prefetch = 0 : i64, scratch_operands = 2 : i64, tpu.core_type = #tpu.core_type<tc>, window_params = [{transform_indices = @transform_0, window_bounds = array<i64: 1, 16, 16>}, {transform_indices = @transform_1, window_bounds = array<i64: 1, 1, 16, 16>}, {pipeline_mode = #tpu.pipeline_mode<synchronous>, transform_indices = @transform_2, window_bounds = array<i64: 2, 16, 16>}, {transform_indices = @transform_3, window_bounds = array<i64: 1, 5, 32, 48>}, {transform_indices = @transform_4, window_bounds = array<i64: 1, 5, 16, 16>}, {transform_indices = @transform_5, window_bounds = array<i64: 1, 1, 48>}, {transform_indices = @transform_6, window_bounds = array<i64: 1, 1, 16, 16>}]} {
    %c0 = arith.constant 0 : index
    %c0_0 = arith.constant 0 : index
    %c0_1 = arith.constant 0 : index
    %c0_2 = arith.constant 0 : index
    %0 = vector.load %arg3[%c0, %c0_0, %c0_1, %c0_2] : memref<1x1x16x16xf32, #tpu.memory_space<vmem>>, vector<1x1x16x16xf32>
    %1 = vector.shape_cast %0 : vector<1x1x16x16xf32> to vector<16x16xf32>
    %c0_i32 = arith.constant 0 : i32
    %2 = arith.cmpi eq, %arg1, %c0_i32 : i32
    %3 = arith.extui %2 : i1 to i32
    %c0_i32_3 = arith.constant 0 : i32
    %4 = arith.cmpi ne, %3, %c0_i32_3 : i32
    scf.if %4 {
      %c0_90 = arith.constant 0 : index
      %c0_91 = arith.constant 0 : index
      %c0_92 = arith.constant 0 : index
      %123 = vector.load %arg2[%c0_90, %c0_91, %c0_92] : memref<1x16x16xbf16, #tpu.memory_space<vmem>>, vector<1x16x16xbf16>
      %124 = vector.shape_cast %123 : vector<1x16x16xbf16> to vector<16x16xbf16>
      %c0_93 = arith.constant 0 : index
      %c0_94 = arith.constant 0 : index
      %125 = vector.load %arg9[%c0_93, %c0_94] : memref<16x32xbf16, #tpu.memory_space<vmem>>, vector<16x16xbf16>
      tpu.vector_store %arg9[%c0_93, %c0_94], %124 {strides = array<i32>} : memref<16x32xbf16, #tpu.memory_space<vmem>>, vector<16x16xbf16>,
    } else {
    }
    %c0_i32_4 = arith.constant 0 : i32
    %5 = arith.cmpi ne, %arg1, %c0_i32_4 : i32
    %6 = arith.extui %5 : i1 to i32
    %c0_i32_5 = arith.constant 0 : i32
    %7 = arith.cmpi ne, %6, %c0_i32_5 : i32
    scf.if %7 {
      %c0_90 = arith.constant 0 : index
      %c0_91 = arith.constant 0 : index
      %123 = vector.load %arg10[%c0_90, %c0_91] : memref<16x16xbf16, #tpu.memory_space<vmem>>, vector<16x16xbf16>
      %c0_92 = arith.constant 0 : index
      %c0_93 = arith.constant 0 : index
      %124 = vector.load %arg9[%c0_92, %c0_93] : memref<16x32xbf16, #tpu.memory_space<vmem>>, vector<16x16xbf16>
      tpu.vector_store %arg9[%c0_92, %c0_93], %123 {strides = array<i32>} : memref<16x32xbf16, #tpu.memory_space<vmem>>, vector<16x16xbf16>,
    } else {
    }
    %8 = arith.truncf %1 : vector<16x16xf32> to vector<16x16xbf16>
    %c0_6 = arith.constant 0 : index
    %c16 = arith.constant 16 : index
    %9 = vector.load %arg9[%c0_6, %c16] : memref<16x32xbf16, #tpu.memory_space<vmem>>, vector<16x16xbf16>
    tpu.vector_store %arg9[%c0_6, %c16], %8 {strides = array<i32>} : memref<16x32xbf16, #tpu.memory_space<vmem>>, vector<16x16xbf16>,
    %c0_7 = arith.constant 0 : index
    %c0_8 = arith.constant 0 : index
    %10 = vector.load %arg9[%c0_7, %c0_8] : memref<16x32xbf16, #tpu.memory_space<vmem>>, vector<16x32xbf16>
    %c0_9 = arith.constant 0 : index
    %c0_10 = arith.constant 0 : index
    %c0_11 = arith.constant 0 : index
    %c0_12 = arith.constant 0 : index
    %11 = vector.load %arg5[%c0_9, %c0_10, %c0_11, %c0_12] : memref<1x5x32x48xbf16, #tpu.memory_space<vmem>>, vector<1x1x32x48xbf16>
    %12 = vector.shape_cast %11 : vector<1x1x32x48xbf16> to vector<32x48xbf16>
    %cst = arith.constant dense<0.000000e+00> : vector<16x48xf32>
    %13 = tpu.matmul %10, %12, %cst {dimension_numbers = #tpu.dot_dimension_numbers<[1], [0], [0], [1], [0, 0, 1, 1], [], []>} : vector<16x32xbf16>, vector<32x48xbf16>, vector<16x48xf32> -> vector<16x48xf32>
    %14 = arith.extf %10 : vector<16x32xbf16> to vector<16x32xf32>
    %c0_13 = arith.constant 0 : index
    %c0_14 = arith.constant 0 : index
    %c0_15 = arith.constant 0 : index
    %15 = vector.load %arg4[%c0_13, %c0_14, %c0_15] : memref<2x16x16xbf16, #tpu.memory_space<vmem>>, vector<1x16x16xbf16>
    %16 = vector.shape_cast %15 : vector<1x16x16xbf16> to vector<16x16xbf16>
    %cst_16 = arith.constant dense<0.000000e+00> : vector<16x32xf32>
    %17 = tpu.matmul %16, %10, %cst_16 {dimension_numbers = #tpu.dot_dimension_numbers<[1], [0], [0], [1], [0, 0, 1, 1], [], []>} : vector<16x16xbf16>, vector<16x32xbf16>, vector<16x32xf32> -> vector<16x32xf32>
    %c0_17 = arith.constant 0 : index
    %c1 = arith.constant 1 : index
    %c0_18 = arith.constant 0 : index
    %c0_19 = arith.constant 0 : index
    %18 = vector.load %arg5[%c0_17, %c1, %c0_18, %c0_19] : memref<1x5x32x48xbf16, #tpu.memory_space<vmem>>, vector<1x1x32x48xbf16>
    %19 = vector.shape_cast %18 : vector<1x1x32x48xbf16> to vector<32x48xbf16>
    %20 = arith.truncf %17 : vector<16x32xf32> to vector<16x32xbf16>
    %cst_20 = arith.constant dense<0.000000e+00> : vector<16x48xf32>
    %21 = tpu.matmul %20, %19, %cst_20 {dimension_numbers = #tpu.dot_dimension_numbers<[1], [0], [0], [1], [0, 0, 1, 1], [], []>} : vector<16x32xbf16>, vector<32x48xbf16>, vector<16x48xf32> -> vector<16x48xf32>
    %22 = arith.addf %13, %21 : vector<16x48xf32>
    %23 = arith.truncf %17 : vector<16x32xf32> to vector<16x32xbf16>
    %cst_21 = arith.constant dense<0.000000e+00> : vector<16x32xf32>
    %24 = tpu.matmul %16, %23, %cst_21 {dimension_numbers = #tpu.dot_dimension_numbers<[1], [0], [0], [1], [0, 0, 1, 1], [], []>} : vector<16x16xbf16>, vector<16x32xbf16>, vector<16x32xf32> -> vector<16x32xf32>
    %cst_22 = arith.constant 2.000000e+00 : f32
    %25 = vector.broadcast %cst_22 : f32 to vector<16x32xf32>
    %26 = arith.mulf %25, %24 : vector<16x32xf32>
    %27 = arith.subf %26, %14 : vector<16x32xf32>
    %c0_23 = arith.constant 0 : index
    %c2 = arith.constant 2 : index
    %c0_24 = arith.constant 0 : index
    %c0_25 = arith.constant 0 : index
    %28 = vector.load %arg5[%c0_23, %c2, %c0_24, %c0_25] : memref<1x5x32x48xbf16, #tpu.memory_space<vmem>>, vector<1x1x32x48xbf16>
    %29 = vector.shape_cast %28 : vector<1x1x32x48xbf16> to vector<32x48xbf16>
    %30 = arith.truncf %27 : vector<16x32xf32> to vector<16x32xbf16>
    %cst_26 = arith.constant dense<0.000000e+00> : vector<16x48xf32>
    %31 = tpu.matmul %30, %29, %cst_26 {dimension_numbers = #tpu.dot_dimension_numbers<[1], [0], [0], [1], [0, 0, 1, 1], [], []>} : vector<16x32xbf16>, vector<32x48xbf16>, vector<16x48xf32> -> vector<16x48xf32>
    %32 = arith.addf %22, %31 : vector<16x48xf32>
    %c1_27 = arith.constant 1 : index
    %c0_28 = arith.constant 0 : index
    %c0_29 = arith.constant 0 : index
    %33 = vector.load %arg4[%c1_27, %c0_28, %c0_29] : memref<2x16x16xbf16, #tpu.memory_space<vmem>>, vector<1x16x16xbf16>
    %34 = vector.shape_cast %33 : vector<1x16x16xbf16> to vector<16x16xbf16>
    %cst_30 = arith.constant dense<0.000000e+00> : vector<16x32xf32>
    %35 = tpu.matmul %34, %10, %cst_30 {dimension_numbers = #tpu.dot_dimension_numbers<[1], [0], [0], [1], [0, 0, 1, 1], [], []>} : vector<16x16xbf16>, vector<16x32xbf16>, vector<16x32xf32> -> vector<16x32xf32>
    %c0_31 = arith.constant 0 : index
    %c3 = arith.constant 3 : index
    %c0_32 = arith.constant 0 : index
    %c0_33 = arith.constant 0 : index
    %36 = vector.load %arg5[%c0_31, %c3, %c0_32, %c0_33] : memref<1x5x32x48xbf16, #tpu.memory_space<vmem>>, vector<1x1x32x48xbf16>
    %37 = vector.shape_cast %36 : vector<1x1x32x48xbf16> to vector<32x48xbf16>
    %38 = arith.truncf %35 : vector<16x32xf32> to vector<16x32xbf16>
    %cst_34 = arith.constant dense<0.000000e+00> : vector<16x48xf32>
    %39 = tpu.matmul %38, %37, %cst_34 {dimension_numbers = #tpu.dot_dimension_numbers<[1], [0], [0], [1], [0, 0, 1, 1], [], []>} : vector<16x32xbf16>, vector<32x48xbf16>, vector<16x48xf32> -> vector<16x48xf32>
    %40 = arith.addf %32, %39 : vector<16x48xf32>
    %41 = arith.truncf %35 : vector<16x32xf32> to vector<16x32xbf16>
    %cst_35 = arith.constant dense<0.000000e+00> : vector<16x32xf32>
    %42 = tpu.matmul %34, %41, %cst_35 {dimension_numbers = #tpu.dot_dimension_numbers<[1], [0], [0], [1], [0, 0, 1, 1], [], []>} : vector<16x16xbf16>, vector<16x32xbf16>, vector<16x32xf32> -> vector<16x32xf32>
    %cst_36 = arith.constant 2.000000e+00 : f32
    %43 = vector.broadcast %cst_36 : f32 to vector<16x32xf32>
    %44 = arith.mulf %43, %42 : vector<16x32xf32>
    %45 = arith.subf %44, %14 : vector<16x32xf32>
    %c0_37 = arith.constant 0 : index
    %c4 = arith.constant 4 : index
    %c0_38 = arith.constant 0 : index
    %c0_39 = arith.constant 0 : index
    %46 = vector.load %arg5[%c0_37, %c4, %c0_38, %c0_39] : memref<1x5x32x48xbf16, #tpu.memory_space<vmem>>, vector<1x1x32x48xbf16>
    %47 = vector.shape_cast %46 : vector<1x1x32x48xbf16> to vector<32x48xbf16>
    %48 = arith.truncf %45 : vector<16x32xf32> to vector<16x32xbf16>
    %cst_40 = arith.constant dense<0.000000e+00> : vector<16x48xf32>
    %49 = tpu.matmul %48, %47, %cst_40 {dimension_numbers = #tpu.dot_dimension_numbers<[1], [0], [0], [1], [0, 0, 1, 1], [], []>} : vector<16x32xbf16>, vector<32x48xbf16>, vector<16x48xf32> -> vector<16x48xf32>
    %50 = arith.addf %40, %49 : vector<16x48xf32>
    %c0_41 = arith.constant 0 : index
    %c0_42 = arith.constant 0 : index
    %c0_43 = arith.constant 0 : index
    %51 = vector.load %arg7[%c0_41, %c0_42, %c0_43] : memref<1x1x48xf32, #tpu.memory_space<vmem>>, vector<1x1x48xf32>
    %52 = vector.shape_cast %51 : vector<1x1x48xf32> to vector<1x48xf32>
    %53 = vector.broadcast %52 : vector<1x48xf32> to vector<16x48xf32>
    %54 = arith.addf %50, %53 : vector<16x48xf32>
    %55 = vector.extract_strided_slice %54 {offsets = [0, 0], sizes = [16, 16], strides = [1, 1]} : vector<16x48xf32> to vector<16x16xf32>
    %56 = arith.negf %55 : vector<16x16xf32>
    %57 = math.exp %56 : vector<16x16xf32>
    %cst_44 = arith.constant 1.000000e+00 : f32
    %58 = vector.broadcast %cst_44 : f32 to vector<16x16xf32>
    %59 = arith.addf %58, %57 : vector<16x16xf32>
    %60 = arith.divf %58, %59 : vector<16x16xf32>
    %61 = vector.extract_strided_slice %54 {offsets = [0, 16], sizes = [16, 16], strides = [1, 1]} : vector<16x48xf32> to vector<16x16xf32>
    %62 = arith.negf %61 : vector<16x16xf32>
    %63 = math.exp %62 : vector<16x16xf32>
    %cst_45 = arith.constant 1.000000e+00 : f32
    %64 = vector.broadcast %cst_45 : f32 to vector<16x16xf32>
    %65 = arith.addf %64, %63 : vector<16x16xf32>
    %66 = arith.divf %64, %65 : vector<16x16xf32>
    %67 = vector.extract_strided_slice %54 {offsets = [0, 32], sizes = [16, 16], strides = [1, 1]} : vector<16x48xf32> to vector<16x16xf32>
    %68 = arith.mulf %60, %1 : vector<16x16xf32>
    %c0_46 = arith.constant 0 : index
    %c0_47 = arith.constant 0 : index
    %c0_48 = arith.constant 0 : index
    %c0_49 = arith.constant 0 : index
    %69 = vector.load %arg6[%c0_46, %c0_47, %c0_48, %c0_49] : memref<1x5x16x16xbf16, #tpu.memory_space<vmem>>, vector<1x1x16x16xbf16>
    %70 = vector.shape_cast %69 : vector<1x1x16x16xbf16> to vector<16x16xbf16>
    %71 = arith.truncf %68 : vector<16x16xf32> to vector<16x16xbf16>
    %cst_50 = arith.constant dense<0.000000e+00> : vector<16x16xf32>
    %72 = tpu.matmul %71, %70, %cst_50 {dimension_numbers = #tpu.dot_dimension_numbers<[1], [0], [0], [1], [0, 0, 1, 1], [], []>} : vector<16x16xbf16>, vector<16x16xbf16>, vector<16x16xf32> -> vector<16x16xf32>
    %73 = arith.addf %67, %72 : vector<16x16xf32>
    %c0_51 = arith.constant 0 : index
    %c0_52 = arith.constant 0 : index
    %c0_53 = arith.constant 0 : index
    %74 = vector.load %arg4[%c0_51, %c0_52, %c0_53] : memref<2x16x16xbf16, #tpu.memory_space<vmem>>, vector<1x16x16xbf16>
    %75 = vector.shape_cast %74 : vector<1x16x16xbf16> to vector<16x16xbf16>
    %76 = arith.truncf %68 : vector<16x16xf32> to vector<16x16xbf16>
    %cst_54 = arith.constant dense<0.000000e+00> : vector<16x16xf32>
    %77 = tpu.matmul %75, %76, %cst_54 {dimension_numbers = #tpu.dot_dimension_numbers<[1], [0], [0], [1], [0, 0, 1, 1], [], []>} : vector<16x16xbf16>, vector<16x16xbf16>, vector<16x16xf32> -> vector<16x16xf32>
    %c0_55 = arith.constant 0 : index
    %c1_56 = arith.constant 1 : index
    %c0_57 = arith.constant 0 : index
    %c0_58 = arith.constant 0 : index
    %78 = vector.load %arg6[%c0_55, %c1_56, %c0_57, %c0_58] : memref<1x5x16x16xbf16, #tpu.memory_space<vmem>>, vector<1x1x16x16xbf16>
    %79 = vector.shape_cast %78 : vector<1x1x16x16xbf16> to vector<16x16xbf16>
    %80 = arith.truncf %77 : vector<16x16xf32> to vector<16x16xbf16>
    %cst_59 = arith.constant dense<0.000000e+00> : vector<16x16xf32>
    %81 = tpu.matmul %80, %79, %cst_59 {dimension_numbers = #tpu.dot_dimension_numbers<[1], [0], [0], [1], [0, 0, 1, 1], [], []>} : vector<16x16xbf16>, vector<16x16xbf16>, vector<16x16xf32> -> vector<16x16xf32>
    %82 = arith.addf %73, %81 : vector<16x16xf32>
    %83 = arith.truncf %77 : vector<16x16xf32> to vector<16x16xbf16>
    %cst_60 = arith.constant dense<0.000000e+00> : vector<16x16xf32>
    %84 = tpu.matmul %75, %83, %cst_60 {dimension_numbers = #tpu.dot_dimension_numbers<[1], [0], [0], [1], [0, 0, 1, 1], [], []>} : vector<16x16xbf16>, vector<16x16xbf16>, vector<16x16xf32> -> vector<16x16xf32>
    %cst_61 = arith.constant 2.000000e+00 : f32
    %85 = vector.broadcast %cst_61 : f32 to vector<16x16xf32>
    %86 = arith.mulf %85, %84 : vector<16x16xf32>
    %87 = arith.subf %86, %68 : vector<16x16xf32>
    %c0_62 = arith.constant 0 : index
    %c2_63 = arith.constant 2 : index
    %c0_64 = arith.constant 0 : index
    %c0_65 = arith.constant 0 : index
    %88 = vector.load %arg6[%c0_62, %c2_63, %c0_64, %c0_65] : memref<1x5x16x16xbf16, #tpu.memory_space<vmem>>, vector<1x1x16x16xbf16>
    %89 = vector.shape_cast %88 : vector<1x1x16x16xbf16> to vector<16x16xbf16>
    %90 = arith.truncf %87 : vector<16x16xf32> to vector<16x16xbf16>
    %cst_66 = arith.constant dense<0.000000e+00> : vector<16x16xf32>
    %91 = tpu.matmul %90, %89, %cst_66 {dimension_numbers = #tpu.dot_dimension_numbers<[1], [0], [0], [1], [0, 0, 1, 1], [], []>} : vector<16x16xbf16>, vector<16x16xbf16>, vector<16x16xf32> -> vector<16x16xf32>
    %92 = arith.addf %82, %91 : vector<16x16xf32>
    %c1_67 = arith.constant 1 : index
    %c0_68 = arith.constant 0 : index
    %c0_69 = arith.constant 0 : index
    %93 = vector.load %arg4[%c1_67, %c0_68, %c0_69] : memref<2x16x16xbf16, #tpu.memory_space<vmem>>, vector<1x16x16xbf16>
    %94 = vector.shape_cast %93 : vector<1x16x16xbf16> to vector<16x16xbf16>
    %95 = arith.truncf %68 : vector<16x16xf32> to vector<16x16xbf16>
    %cst_70 = arith.constant dense<0.000000e+00> : vector<16x16xf32>
    %96 = tpu.matmul %94, %95, %cst_70 {dimension_numbers = #tpu.dot_dimension_numbers<[1], [0], [0], [1], [0, 0, 1, 1], [], []>} : vector<16x16xbf16>, vector<16x16xbf16>, vector<16x16xf32> -> vector<16x16xf32>
    %c0_71 = arith.constant 0 : index
    %c3_72 = arith.constant 3 : index
    %c0_73 = arith.constant 0 : index
    %c0_74 = arith.constant 0 : index
    %97 = vector.load %arg6[%c0_71, %c3_72, %c0_73, %c0_74] : memref<1x5x16x16xbf16, #tpu.memory_space<vmem>>, vector<1x1x16x16xbf16>
    %98 = vector.shape_cast %97 : vector<1x1x16x16xbf16> to vector<16x16xbf16>
    %99 = arith.truncf %96 : vector<16x16xf32> to vector<16x16xbf16>
    %cst_75 = arith.constant dense<0.000000e+00> : vector<16x16xf32>
    %100 = tpu.matmul %99, %98, %cst_75 {dimension_numbers = #tpu.dot_dimension_numbers<[1], [0], [0], [1], [0, 0, 1, 1], [], []>} : vector<16x16xbf16>, vector<16x16xbf16>, vector<16x16xf32> -> vector<16x16xf32>
    %101 = arith.addf %92, %100 : vector<16x16xf32>
    %102 = arith.truncf %96 : vector<16x16xf32> to vector<16x16xbf16>
    %cst_76 = arith.constant dense<0.000000e+00> : vector<16x16xf32>
    %103 = tpu.matmul %94, %102, %cst_76 {dimension_numbers = #tpu.dot_dimension_numbers<[1], [0], [0], [1], [0, 0, 1, 1], [], []>} : vector<16x16xbf16>, vector<16x16xbf16>, vector<16x16xf32> -> vector<16x16xf32>
    %cst_77 = arith.constant 2.000000e+00 : f32
    %104 = vector.broadcast %cst_77 : f32 to vector<16x16xf32>
    %105 = arith.mulf %104, %103 : vector<16x16xf32>
    %106 = arith.subf %105, %68 : vector<16x16xf32>
    %c0_78 = arith.constant 0 : index
    %c4_79 = arith.constant 4 : index
    %c0_80 = arith.constant 0 : index
    %c0_81 = arith.constant 0 : index
    %107 = vector.load %arg6[%c0_78, %c4_79, %c0_80, %c0_81] : memref<1x5x16x16xbf16, #tpu.memory_space<vmem>>, vector<1x1x16x16xbf16>
    %108 = vector.shape_cast %107 : vector<1x1x16x16xbf16> to vector<16x16xbf16>
    %109 = arith.truncf %106 : vector<16x16xf32> to vector<16x16xbf16>
    %cst_82 = arith.constant dense<0.000000e+00> : vector<16x16xf32>
    %110 = tpu.matmul %109, %108, %cst_82 {dimension_numbers = #tpu.dot_dimension_numbers<[1], [0], [0], [1], [0, 0, 1, 1], [], []>} : vector<16x16xbf16>, vector<16x16xbf16>, vector<16x16xf32> -> vector<16x16xf32>
    %111 = arith.addf %101, %110 : vector<16x16xf32>
    %112 = math.tanh %111 : vector<16x16xf32>
    %113 = arith.mulf %66, %1 : vector<16x16xf32>
    %cst_83 = arith.constant 1.000000e+00 : f32
    %114 = vector.broadcast %cst_83 : f32 to vector<16x16xf32>
    %115 = arith.subf %114, %66 : vector<16x16xf32>
    %116 = arith.mulf %115, %112 : vector<16x16xf32>
    %117 = arith.addf %113, %116 : vector<16x16xf32>
    %c0_84 = arith.constant 0 : index
    %c0_85 = arith.constant 0 : index
    %c0_86 = arith.constant 0 : index
    %c0_87 = arith.constant 0 : index
    %118 = vector.load %arg8[%c0_84, %c0_85, %c0_86, %c0_87] : memref<1x1x16x16xf32, #tpu.memory_space<vmem>>, vector<1x1x16x16xf32>
    %119 = vector.shape_cast %118 : vector<1x1x16x16xf32> to vector<16x16xf32>
    %120 = vector.shape_cast %117 : vector<16x16xf32> to vector<1x1x16x16xf32>
    tpu.vector_store %arg8[%c0_84, %c0_85, %c0_86, %c0_87], %120 {strides = array<i32>} : memref<1x1x16x16xf32, #tpu.memory_space<vmem>>, vector<1x1x16x16xf32>,
    %121 = arith.truncf %117 : vector<16x16xf32> to vector<16x16xbf16>
    %c0_88 = arith.constant 0 : index
    %c0_89 = arith.constant 0 : index
    %122 = vector.load %arg10[%c0_88, %c0_89] : memref<16x16xbf16, #tpu.memory_space<vmem>>, vector<16x16xbf16>
    tpu.vector_store %arg10[%c0_88, %c0_89], %121 {strides = array<i32>} : memref<16x16xbf16, #tpu.memory_space<vmem>>, vector<16x16xbf16>,
    return
  }
  func.func @transform_0(%arg0: i32, %arg1: i32) -> (i32, i32, i32) {
    %c0_i32 = arith.constant 0 : i32
    %c0_i32_0 = arith.constant 0 : i32
    %c0_i32_1 = arith.constant 0 : i32
    return %arg0, %c0_i32, %c0_i32_0 : i32, i32, i32
  }
  func.func @transform_1(%arg0: i32, %arg1: i32) -> (i32, i32, i32, i32) {
    %c0_i32 = arith.constant 0 : i32
    %c0_i32_0 = arith.constant 0 : i32
    %c0_i32_1 = arith.constant 0 : i32
    return %arg1, %arg0, %c0_i32, %c0_i32_0 : i32, i32, i32, i32
  }
  func.func @transform_2(%arg0: i32, %arg1: i32) -> (i32, i32, i32) {
    %c0_i32 = arith.constant 0 : i32
    %c0_i32_0 = arith.constant 0 : i32
    %c0_i32_1 = arith.constant 0 : i32
    %c0_i32_2 = arith.constant 0 : i32
    return %c0_i32, %c0_i32_0, %c0_i32_1 : i32, i32, i32
  }
  func.func @transform_3(%arg0: i32, %arg1: i32) -> (i32, i32, i32, i32) {
    %c0_i32 = arith.constant 0 : i32
    %c0_i32_0 = arith.constant 0 : i32
    %c0_i32_1 = arith.constant 0 : i32
    %c0_i32_2 = arith.constant 0 : i32
    return %arg1, %c0_i32, %c0_i32_0, %c0_i32_1 : i32, i32, i32, i32
  }
  func.func @transform_4(%arg0: i32, %arg1: i32) -> (i32, i32, i32, i32) {
    %c0_i32 = arith.constant 0 : i32
    %c0_i32_0 = arith.constant 0 : i32
    %c0_i32_1 = arith.constant 0 : i32
    %c0_i32_2 = arith.constant 0 : i32
    return %arg1, %c0_i32, %c0_i32_0, %c0_i32_1 : i32, i32, i32, i32
  }
  func.func @transform_5(%arg0: i32, %arg1: i32) -> (i32, i32, i32) {
    %c0_i32 = arith.constant 0 : i32
    %c0_i32_0 = arith.constant 0 : i32
    %c0_i32_1 = arith.constant 0 : i32
    return %arg1, %c0_i32, %c0_i32_0 : i32, i32, i32
  }
  func.func @transform_6(%arg0: i32, %arg1: i32) -> (i32, i32, i32, i32) {
    %c0_i32 = arith.constant 0 : i32
    %c0_i32_0 = arith.constant 0 : i32
    %c0_i32_1 = arith.constant 0 : i32
    return %arg1, %arg0, %c0_i32, %c0_i32_0 : i32, i32, i32, i32
  }
}

</mosaic_0001>

<llo_original>
// kernel: forward.1
$region0: #{forward.1}
  #allocation0 [shape = 'u32[]', space=smem, size = 0x4, offset = 0x4, fixed_abs, tag = 'smem constant byte address 0x4 - core index']
  #allocation1 [shape = 'u32[72,128]{1,0:T(1,128)}', space=vmem, size = 0x9000, scoped, tag = 'internal scratch']
  #allocation2 [shape = 'bf16[16,32]{1,0:T(8,128)(2,1)}', space=vmem, size = 0x1000, scoped, tag = 'scratch operand']
  #allocation3 [shape = 'bf16[16,16]{1,0:T(8,128)(2,1)}', space=vmem, size = 0x1000, scoped, tag = 'scratch operand']
  %s0 = inlined_call_operand.vmem [shape: bf16[2,16,16], index: 0, kind: input, shape index: {}]
  %s1 = inlined_call_operand.vmem [shape: f32[2,2,16,16], index: 1, kind: input, shape index: {}]
  %s2 = inlined_call_operand.vmem [shape: bf16[2,16,16], index: 2, kind: input, shape index: {}]
  %s3 = inlined_call_operand.hbm [shape: bf16[2,5,32,48], index: 3, kind: input, shape index: {}]
  %s4 = inlined_call_operand.vmem [shape: bf16[2,5,16,16], index: 4, kind: input, shape index: {}]
  %s5 = inlined_call_operand.vmem [shape: f32[2,1,48], index: 5, kind: input, shape index: {}]
  %s6 = inlined_call_operand.vmem [shape: f32[2,2,16,16], index: 6, kind: output, shape index: {}]
  %s7 = sld [smem:[#allocation0]]
  $region69: #{forward.1} parent=0
    _
  %s9 = ssub.s32 1, %s7
  %s10 = scalar_select 0, %s9, %s7
  $region1: #{forward.1} parent=0
    #allocation4 [shape = 'u8[81920]{0}', space=vmem, size = 0x14000, scoped, tag = 'input window, operand 3']
    #allocation5 [shape = 's32[2]{0}', space=sflag, size = 0x8, scoped, tag = 'scoped memory for forward.1']
    %11 = vsyncpa [#allocation5], 0
    %s12 = scalar_lea.sflag [#allocation5], 1
    %13 = vsyncpa %s12, 0
    loop: start=0, step=1, limit=6
    $region2: #{forward.1} parent=1 // loop_pre_header
      _
    $region3: #{forward.1} parent=1 // loop_header
      %s15 = sphi 0, %s19
      %p16 = scmp.ge.s32.totalorder %s15, 6
      %s22 = sphi 0, %s34
      %s23 = sphi 0, %s30
      %s24 = sphi 0, %s22
      %s25 = sphi 0, %s23
      %s26 = sphi 0, %s24
      %s27 = sphi 0, %s25
      %s37 = sphi 0, %s39
      %s40 = sphi 0, %s37
      %s41 = sphi 0, %s40
      %s57 = sphi 0, %s41
      %s65 = sphi 0, %s67
      %s68 = sphi 0, %s65
      %s69 = sphi 0, %s68
      %s85 = sphi 0, %s69
      %s89 = sphi 0, %s89
      %s91 = sphi 0, %s89
      %s92 = sphi 0, %s91
      %s106 = sphi 0, %s92
      %s112 = sphi 0, %s114
      %s115 = sphi 0, %s112
      %s116 = sphi 0, %s115
      %s132 = sphi 0, %s116
      %s138 = sphi 0, %s140
      %s141 = sphi 0, %s138
      %s142 = sphi 0, %s141
      %s158 = sphi 0, %s142
      %s164 = sphi 0, %s166
      %s167 = sphi 0, %s164
      %s168 = sphi 0, %s167
      %s184 = sphi 0, %s168
      %s192 = sphi 0, %s194
      %s195 = sphi 0, %s192
      %s196 = sphi 0, %s195
      %s212 = sphi 0, %s196
    $region4: #{forward.1} parent=1 // loop_header_branch
      %18 = sbr.rel (%p16) target = $region8
    $region5: #{forward.1} parent=1 // loop_body
      %s20 = ssub.s32 %s15, 1
      %s21 = ssub.s32 %s15, 2
      %s28 = sadd.s32 1, %s23
      %p29 = scmp.ge.s32.totalorder %s28, 2
      %s30 = scalar_select %p29, 0, %s28
      %s31 = sadd.s32 1, %s22
      %s32 = scalar_select %p29, %s31, %s22
      %p33 = scmp.ge.s32.totalorder %s32, 2
      %s34 = scalar_select %p33, 0, %s32
      %s35 = ssub.s32 %s22, %s34
      %p36 = scmp.eq.s32.totalorder %s35, 0
      %s38 = sadd.s32 %s37, 1
      %s39 = scalar_select %p36, %s37, %s38
      %p42 = pneg %p36
      %p43 = scmp.eq.s32.totalorder %s15, 3
      %p44 = por %p42, %p43
      %p45 = scmp.ne.s32.totalorder %s37, %s40
      %p46 = scmp.eq.s32.totalorder %s15, 0
      %p47 = por %p45, %p46
      %p48 = scmp.ne.s32.totalorder %s37, %s40
      %p49 = scmp.eq.s32.totalorder %s20, 3
      %p50 = por %p48, %p49
      %p51 = scmp.ne.s32.totalorder %s40, %s41
      %p52 = scmp.eq.s32.totalorder %s20, 0
      %p53 = por %p51, %p52
      %p54 = scmp.ne.s32.totalorder %s40, %s41
      %p55 = scmp.eq.s32.totalorder %s21, 3
      %p56 = por %p54, %p55
      %p58 = scmp.ne.s32.totalorder %s41, %s57
      %p59 = scmp.eq.s32.totalorder %s21, 0
      %p60 = por %p58, %p59
      %s61 = ssub.s32 %s23, %s30
      %s62 = ssub.s32 %s22, %s34
      %s63 = sor.u32 %s61, %s62
      %p64 = scmp.eq.s32.totalorder %s63, 0
      %s66 = sadd.s32 %s65, 1
      %s67 = scalar_select %p64, %s65, %s66
      %p70 = pneg %p64
      %p71 = scmp.eq.s32.totalorder %s15, 3
      %p72 = por %p70, %p71
      %p73 = scmp.ne.s32.totalorder %s65, %s68
      %p74 = scmp.eq.s32.totalorder %s15, 0
      %p75 = por %p73, %p74
      %p76 = scmp.ne.s32.totalorder %s65, %s68
      %p77 = scmp.eq.s32.totalorder %s20, 3
      %p78 = por %p76, %p77
      %p79 = scmp.ne.s32.totalorder %s68, %s69
      %p80 = scmp.eq.s32.totalorder %s20, 0
      %p81 = por %p79, %p80
      %p82 = scmp.ne.s32.totalorder %s68, %s69
      %p83 = scmp.eq.s32.totalorder %s21, 3
      %p84 = por %p82, %p83
      %p86 = scmp.ne.s32.totalorder %s69, %s85
      %p87 = scmp.eq.s32.totalorder %s21, 0
      %p88 = por %p86, %p87
      %s90 = sadd.s32 %s89, 1
      %p93 = scmp.eq.s32.totalorder %s15, 3
      %p94 = scmp.ne.s32.totalorder %s89, %s91
      %p95 = scmp.eq.s32.totalorder %s15, 0
      %p96 = por %p94, %p95
      %p97 = scmp.ne.s32.totalorder %s89, %s91
      %p98 = scmp.eq.s32.totalorder %s20, 3
      %p99 = por %p97, %p98
      %p100 = scmp.ne.s32.totalorder %s91, %s92
      %p101 = scmp.eq.s32.totalorder %s20, 0
      %p102 = por %p100, %p101
      %p103 = scmp.ne.s32.totalorder %s91, %s92
      %p104 = scmp.eq.s32.totalorder %s21, 3
      %p105 = por %p103, %p104
      %p107 = scmp.ne.s32.totalorder %s92, %s106
      %p108 = scmp.eq.s32.totalorder %s21, 0
      %p109 = por %p107, %p108
      %s110 = ssub.s32 %s23, %s30
      %p111 = scmp.eq.s32.totalorder %s110, 0
      %s113 = sadd.s32 %s112, 1
      %s114 = scalar_select %p111, %s112, %s113
      %p117 = pneg %p111
      %p118 = scmp.eq.s32.totalorder %s15, 3
      %p119 = por %p117, %p118
      %p120 = scmp.ne.s32.totalorder %s112, %s115
      %p121 = scmp.eq.s32.totalorder %s15, 0
      %p122 = por %p120, %p121
      %p123 = scmp.ne.s32.totalorder %s112, %s115
      %p124 = scmp.eq.s32.totalorder %s20, 3
      %p125 = por %p123, %p124
      %p126 = scmp.ne.s32.totalorder %s115, %s116
      %p127 = scmp.eq.s32.totalorder %s20, 0
      %p128 = por %p126, %p127
      %p129 = scmp.ne.s32.totalorder %s115, %s116
      %p130 = scmp.eq.s32.totalorder %s21, 3
      %p131 = por %p129, %p130
      %p133 = scmp.ne.s32.totalorder %s116, %s132
      %p134 = scmp.eq.s32.totalorder %s21, 0
      %p135 = por %p133, %p134
      %s136 = ssub.s32 %s23, %s30
      %p137 = scmp.eq.s32.totalorder %s136, 0
      %s139 = sadd.s32 %s138, 1
      %s140 = scalar_select %p137, %s138, %s139
      %p143 = pneg %p137
      %p144 = scmp.eq.s32.totalorder %s15, 3
      %p145 = por %p143, %p144
      %p146 = scmp.ne.s32.totalorder %s138, %s141
      %p147 = scmp.eq.s32.totalorder %s15, 0
      %p148 = por %p146, %p147
      %p149 = scmp.ne.s32.totalorder %s138, %s141
      %p150 = scmp.eq.s32.totalorder %s20, 3
      %p151 = por %p149, %p150
      %p152 = scmp.ne.s32.totalorder %s141, %s142
      %p153 = scmp.eq.s32.totalorder %s20, 0
      %p154 = por %p152, %p153
      %p155 = scmp.ne.s32.totalorder %s141, %s142
      %p156 = scmp.eq.s32.totalorder %s21, 3
      %p157 = por %p155, %p156
      %p159 = scmp.ne.s32.totalorder %s142, %s158
      %p160 = scmp.eq.s32.totalorder %s21, 0
      %p161 = por %p159, %p160
      %s162 = ssub.s32 %s23, %s30
      %p163 = scmp.eq.s32.totalorder %s162, 0
      %s165 = sadd.s32 %s164, 1
      %s166 = scalar_select %p163, %s164, %s165
      %p169 = pneg %p163
      %p170 = scmp.eq.s32.totalorder %s15, 3
      %p171 = por %p169, %p170
      %p172 = scmp.ne.s32.totalorder %s164, %s167
      %p173 = scmp.eq.s32.totalorder %s15, 0
      %p174 = por %p172, %p173
      %p175 = scmp.ne.s32.totalorder %s164, %s167
      %p176 = scmp.eq.s32.totalorder %s20, 3
      %p177 = por %p175, %p176
      %p178 = scmp.ne.s32.totalorder %s167, %s168
      %p179 = scmp.eq.s32.totalorder %s20, 0
      %p180 = por %p178, %p179
      %p181 = scmp.ne.s32.totalorder %s167, %s168
      %p182 = scmp.eq.s32.totalorder %s21, 3
      %p183 = por %p181, %p182
      %p185 = scmp.ne.s32.totalorder %s168, %s184
      %p186 = scmp.eq.s32.totalorder %s21, 0
      %p187 = por %p185, %p186
      %s188 = ssub.s32 %s23, %s30
      %s189 = ssub.s32 %s22, %s34
      %s190 = sor.u32 %s188, %s189
      %p191 = scmp.eq.s32.totalorder %s190, 0
      %s193 = sadd.s32 %s192, 1
      %s194 = scalar_select %p191, %s192, %s193
      %p197 = pneg %p191
      %p198 = scmp.eq.s32.totalorder %s15, 3
      %p199 = por %p197, %p198
      %p200 = scmp.ne.s32.totalorder %s192, %s195
      %p201 = scmp.eq.s32.totalorder %s15, 0
      %p202 = por %p200, %p201
      %p203 = scmp.ne.s32.totalorder %s192, %s195
      %p204 = scmp.eq.s32.totalorder %s20, 3
      %p205 = por %p203, %p204
      %p206 = scmp.ne.s32.totalorder %s195, %s196
      %p207 = scmp.eq.s32.totalorder %s20, 0
      %p208 = por %p206, %p207
      %p209 = scmp.ne.s32.totalorder %s195, %s196
      %p210 = scmp.eq.s32.totalorder %s21, 3
      %p211 = por %p209, %p210
      %p213 = scmp.ne.s32.totalorder %s196, %s212
      %p214 = scmp.eq.s32.totalorder %s21, 0
      %p215 = por %p213, %p214
      %p216 = scmp.le.s32.totalorder 1, %s15
      %p217 = scmp.lt.s32.totalorder %s15, 5
      %p218 = pnand %p216, %p217
      %p219 = pneg %p218
      // Predicated region
      $region9: #{forward.1} parent=5 // pred_check
        _
      $region10: #{forward.1} parent=5 // pred_check_branch
        %221 = sbr.rel (%p218) target = $region12
      $region11: #{forward.1} parent=5 // pred_region
        %s222 = ssub.s32 %s15, 1
        // Predicated region
        $region13: #{forward.1} parent=11 // pred_check
          %p223 = pneg %p102
        $region14: #{forward.1} parent=11 // pred_check_branch
          %225 = sbr.rel (%p223) target = $region16
        $region15: #{forward.1} parent=11 // pred_region
          _
        $region16: #{forward.1} parent=11 // pred_fallthru
          _
      $region12: #{forward.1} parent=5 // pred_fallthru
        _
      %p226 = scmp.lt.s32.totalorder %s15, 4
      // Predicated region
      $region17: #{forward.1} parent=5 // pred_check
        %p227 = pneg %p226
      $region18: #{forward.1} parent=5 // pred_check_branch
        %229 = sbr.rel (%p227) target = $region20
      $region19: #{forward.1} parent=5 // pred_region
        // Predicated region
        $region21: #{forward.1} parent=19 // pred_check
          %p230 = pneg %p47
        $region22: #{forward.1} parent=19 // pred_check_branch
          %232 = sbr.rel (%p230) target = $region24
        $region23: #{forward.1} parent=19 // pred_region
          %p233 = scmp.lt.s32.totalorder %s22, 1
          %s234 = scalar_select %p233, %s22, 1
          %s235 = smul.addr %s234, 2
          %s236 = smul.addr %s235, 4
          %s237 = scalar_lea.vmem %s0, %s236
        $region24: #{forward.1} parent=19 // pred_fallthru
          _
        // Predicated region
        $region25: #{forward.1} parent=19 // pred_check
          %p238 = pneg %p75
        $region26: #{forward.1} parent=19 // pred_check_branch
          %240 = sbr.rel (%p238) target = $region28
        $region27: #{forward.1} parent=19 // pred_region
          %p241 = scmp.lt.s32.totalorder %s23, 1
          %s242 = scalar_select %p241, %s23, 1
          %p243 = scmp.lt.s32.totalorder %s22, 1
          %s244 = scalar_select %p243, %s22, 1
          %s245 = smul.addr %s244, 2
          %s246 = smul.addr %s242, 4
          %s247 = sadd.s32 %s245, %s246
          %s248 = smul.addr %s247, 8
          %s249 = scalar_lea.vmem %s1, %s248
        $region28: #{forward.1} parent=19 // pred_fallthru
          _
        // Predicated region
        $region29: #{forward.1} parent=19 // pred_check
          %p250 = pneg %p122
        $region30: #{forward.1} parent=19 // pred_check_branch
          %252 = sbr.rel (%p250) target = $region32
        $region31: #{forward.1} parent=19 // pred_region
          %s253 = sand.u32 %s112, 1
          %s254 = scalar_lea.sflag [#allocation5], %s253
          %s255 = sand.u32 %s112, 1
          %s256 = smul.addr %s255, 80
          %s257 = scalar_lea.vmem [#allocation4], %s256
          %259 = vsyncadd %s254, 0
          %s260 = smul.addr %s23, 20
          %s261 = smul.addr %s260, 4
          %s262 = scalar_lea.hbm %s3, %s261
          %s263 = sshll.u32 %s262, 4
          %s264 = int_to_ptr.hbm [resolvable:$true] %s263
          %s265 = sshll.u32 %s257, 4
          %s266 = int_to_ptr.vmem [resolvable:$true] %s265
          %271 = dma.hbm_to_vmem [thread:$0]  %s264, 1280, %s266, %s254, 64, 64, 4
        $region32: #{forward.1} parent=19 // pred_fallthru
          _
        // Predicated region
        $region33: #{forward.1} parent=19 // pred_check
          %p272 = pneg %p148
        $region34: #{forward.1} parent=19 // pred_check_branch
          %274 = sbr.rel (%p272) target = $region36
        $region35: #{forward.1} parent=19 // pred_region
          %p275 = scmp.lt.s32.totalorder %s23, 1
          %s276 = scalar_select %p275, %s23, 1
          %s277 = smul.addr %s276, 10
          %s278 = smul.addr %s277, 4
          %s279 = scalar_lea.vmem %s4, %s278
        $region36: #{forward.1} parent=19 // pred_fallthru
          _
        // Predicated region
        $region37: #{forward.1} parent=19 // pred_check
          %p280 = pneg %p174
        $region38: #{forward.1} parent=19 // pred_check_branch
          %282 = sbr.rel (%p280) target = $region40
        $region39: #{forward.1} parent=19 // pred_region
          %p283 = scmp.lt.s32.totalorder %s23, 1
          %s284 = scalar_select %p283, %s23, 1
          %s285 = scalar_lea.vmem %s5, %s284
        $region40: #{forward.1} parent=19 // pred_fallthru
          _
      $region20: #{forward.1} parent=5 // pred_fallthru
        _
      %p286 = scmp.le.s32.totalorder 1, %s15
      %p287 = scmp.lt.s32.totalorder %s15, 5
      %p288 = pnand %p286, %p287
      %p289 = pneg %p288
      // Predicated region
      $region41: #{forward.1} parent=5 // pred_check
        _
      $region42: #{forward.1} parent=5 // pred_check_branch
        %291 = sbr.rel (%p288) target = $region44
      $region43: #{forward.1} parent=5 // pred_region
        %s292 = ssub.s32 %s15, 1
        %s293 = sand.u32 %s115, 1
        %s294 = scalar_lea.sflag [#allocation5], %s293
        %s295 = sand.u32 %s115, 1
        %s296 = smul.addr %s295, 80
        %s297 = scalar_lea.vmem [#allocation4], %s296
        // Predicated region
        $region45: #{forward.1} parent=43 // pred_check
          %p298 = pneg %p128
        $region46: #{forward.1} parent=43 // pred_check_branch
          %300 = sbr.rel (%p298) target = $region48
        $region47: #{forward.1} parent=43 // pred_region
          %302 = dma.done %s294, 1280
        $region48: #{forward.1} parent=43 // pred_fallthru
          _
        %p303 = scmp.lt.s32.totalorder %s24, 1
        %s304 = scalar_select %p303, %s24, 1
        %s305 = smul.addr %s304, 2
        %s306 = smul.addr %s305, 4
        %s307 = scalar_lea.vmem %s0, %s306
        %p308 = pneg %p53
        %p309 = pneg %p50
        %p310 = scmp.lt.s32.totalorder %s25, 1
        %s311 = scalar_select %p310, %s25, 1
        %p312 = scmp.lt.s32.totalorder %s24, 1
        %s313 = scalar_select %p312, %s24, 1
        %s314 = smul.addr %s313, 2
        %s315 = smul.addr %s311, 4
        %s316 = sadd.s32 %s314, %s315
        %s317 = smul.addr %s316, 8
        %s318 = scalar_lea.vmem %s1, %s317
        %p319 = pneg %p81
        %p320 = pneg %p78
        %p321 = pneg %p102
        %p322 = pneg %p99
        %s323 = sand.u32 %s115, 1
        %s324 = scalar_lea.sflag [#allocation5], %s323
        %s325 = sand.u32 %s115, 1
        %s326 = smul.addr %s325, 80
        %s327 = scalar_lea.vmem [#allocation4], %s326
        %p328 = pneg %p128
        %p329 = pneg %p125
        %p330 = scmp.lt.s32.totalorder %s25, 1
        %s331 = scalar_select %p330, %s25, 1
        %s332 = smul.addr %s331, 10
        %s333 = smul.addr %s332, 4
        %s334 = scalar_lea.vmem %s4, %s333
        %p335 = pneg %p154
        %p336 = pneg %p151
        %p337 = scmp.lt.s32.totalorder %s25, 1
        %s338 = scalar_select %p337, %s25, 1
        %s339 = scalar_lea.vmem %s5, %s338
        %p340 = pneg %p180
        %p341 = pneg %p177
        %p342 = pneg %p208
        %p343 = pneg %p205
        %p344 = scmp.lt.s32.totalorder %s25, 1
        %s345 = scalar_select %p344, %s25, 1
        %p346 = scmp.lt.s32.totalorder %s24, 1
        %s347 = scalar_select %p346, %s24, 1
        %s348 = smul.addr %s347, 2
        %s349 = smul.addr %s345, 4
        %s350 = sadd.s32 %s348, %s349
        %s351 = smul.addr %s350, 8
        %s352 = scalar_lea.vmem %s6, %s351
        %p353 = scmp.lt.s32.totalorder %s24, 1
        %s354 = scalar_select %p353, %s24, 1
        %s355 = smul.addr %s354, 2
        %s356 = smul.addr %s355, 4
        %s357 = scalar_lea.vmem %s0, %s356
        %p358 = scmp.lt.s32.totalorder %s25, 1
        %s359 = scalar_select %p358, %s25, 1
        %p360 = scmp.lt.s32.totalorder %s24, 1
        %s361 = scalar_select %p360, %s24, 1
        %s362 = smul.addr %s361, 2
        %s363 = smul.addr %s359, 4
        %s364 = sadd.s32 %s362, %s363
        %s365 = smul.addr %s364, 8
        %s366 = scalar_lea.vmem %s1, %s365
        %p367 = scmp.lt.s32.totalorder %s25, 1
        %s368 = scalar_select %p367, %s25, 1
        %s369 = smul.addr %s368, 10
        %s370 = smul.addr %s369, 4
        %s371 = scalar_lea.vmem %s4, %s370
        %p372 = scmp.lt.s32.totalorder %s25, 1
        %s373 = scalar_select %p372, %s25, 1
        %s374 = scalar_lea.vmem %s5, %s373
        %p375 = scmp.lt.s32.totalorder %s25, 1
        %s376 = scalar_select %p375, %s25, 1
        %p377 = scmp.lt.s32.totalorder %s24, 1
        %s378 = scalar_select %p377, %s24, 1
        %s379 = smul.addr %s378, 2
        %s380 = smul.addr %s376, 4
        %s381 = sadd.s32 %s379, %s380
        %s382 = smul.addr %s381, 8
        %s383 = scalar_lea.vmem %s6, %s382
        %v385 = vld [vmem:[%s366] sm:$0xff]
        %v386 = vld [vmem:[%s366 + $0x8] sm:$0xff]
        %p387 = scmp.eq.s32.totalorder %s25, 0
        // Predicated region
        $region49: #{forward.1} parent=43 // pred_check
          %p388 = pneg %p387
        $region50: #{forward.1} parent=43 // pred_check_branch
          %390 = sbr.rel (%p388) target = $region52
        $region51: #{forward.1} parent=43 // pred_region
          %v391 = vld [vmem:[%s357] sm:$0xf]
          %v392 = vld [vmem:[%s357 + $0x4] sm:$0xf]
          %vm393 = vcmask 125952
          %394 = vst.msk [vmem:[#allocation2] sm:$0xf] %vm393, %v391
          %395 = vst.msk [vmem:[#allocation2 + $0x4] sm:$0xf] %vm393, %v392
        $region52: #{forward.1} parent=43 // pred_fallthru
          _
        %p396 = scmp.ne.s32.totalorder %s25, 0
        // Predicated region
        $region53: #{forward.1} parent=43 // pred_check
          %p397 = pneg %p396
        $region54: #{forward.1} parent=43 // pred_check_branch
          %399 = sbr.rel (%p397) target = $region56
        $region55: #{forward.1} parent=43 // pred_region
          %v400 = vld [vmem:[#allocation3] sm:$0xf]
          %v401 = vld [vmem:[#allocation3 + $0x4] sm:$0xf]
          %vm402 = vcmask 125952
          %403 = vst.msk [vmem:[#allocation2] sm:$0xf] %vm402, %v400
          %404 = vst.msk [vmem:[#allocation2 + $0x4] sm:$0xf] %vm402, %v401
        $region56: #{forward.1} parent=43 // pred_fallthru
          _
        %v405 = vpack.c.bf16 %v385, %v385
        %v406 = vpack.c.bf16 %v386, %v386
        %409 = vrot.lane.b32.xlu0 %v405, 16
        %v410 = vpop.permute.xlu0 %409
        %411 = vrot.lane.b32.xlu0 %v406, 16
        %v412 = vpop.permute.xlu0 %411
        %vm415 = vcmask 257152
        %416 = vst.msk [vmem:[#allocation2] sm:$0xf] %vm415, %v410
        %417 = vst.msk [vmem:[#allocation2 + $0x4] sm:$0xf] %vm415, %v412
        %v418 = vld [vmem:[#allocation2] sm:$0xf]
        %v419 = vld [vmem:[#allocation2 + $0x4] sm:$0xf]
        %v420 = vld [vmem:[%s297] sm:$0xf]
        %v421 = vld [vmem:[%s297 + $0x4] sm:$0xf]
        %v422 = vld [vmem:[%s297 + $0x8] sm:$0xf]
        %v423 = vld [vmem:[%s297 + $0xc] sm:$0xf]
        %v424 = vunpack.c.l.bf16 %v418
        %v425 = vunpack.c.l.bf16 %v419
        %v426 = vld [vmem:[%s2] sm:$0xf]
        %v427 = vld [vmem:[%s2 + $0x4] sm:$0xf]
        %v430 = vunpack.c.l.b16 %v426
        %v431 = vunpack.c.l.b16 %v427
        %v432 = vpack.c.b16 %v431, %v430
        %v435 = vunpack.c.l.b16 %v418
        %v436 = vunpack.c.l.b16 %v419
        %v437 = vpack.c.b16 %v436, %v435
        %vm439 = vcmask 130048
        %v441 = vsel %vm439, %v432, 0
        %443 = vmatpush.bf16.msra.mxu0 0
        %444 = vmatpush.bf16.msra.mxu0 0
        %445 = vmatpush.bf16.msra.mxu0 0
        %446 = vmatpush.bf16.msra.mxu0 0
        %447 = vmatpush.bf16.msra.mxu0 0
        %448 = vmatpush.bf16.msra.mxu0 0
        %449 = vmatpush.bf16.msra.mxu0 0
        %450 = vmatpush.bf16.msra.mxu0 %v437
        %451 = vmatmul.bf16.gmra.mxu0 %v441
        %v452 = vpop.f32.mrf.mxu0
        %v453 = vadd.f32 0.0, %v452
        %v454 = vpop.f32.mrf.mxu0
        %v455 = vadd.f32 0.0, %v454
        %456 = vdwg.mxu0
        %s457 = scalar_lea.vmem %s297, 16 [#allocation4]
        %v458 = vld [vmem:[%s457] sm:$0xf]
        %v459 = vld [vmem:[%s457 + $0x4] sm:$0xf]
        %v460 = vld [vmem:[%s457 + $0x8] sm:$0xf]
        %v461 = vld [vmem:[%s457 + $0xc] sm:$0xf]
        %v462 = vpack.c.bf16 %v455, %v453
        %v467 = vunpack.c.l.b16 %v458
        %v468 = vunpack.c.l.b16 %v459
        %v469 = vunpack.c.l.b16 %v460
        %v470 = vunpack.c.l.b16 %v461
        %v471 = vpack.c.b16 %v468, %v467
        %v472 = vpack.c.b16 %v470, %v469
        %vm475 = vcmask 261120
        %v477 = vsel %vm475, %v462, 0
        %479 = vmatpush.bf16.msra.mxu0 0
        %480 = vmatpush.bf16.msra.mxu0 0
        %481 = vmatpush.bf16.msra.mxu0 0
        %482 = vmatpush.bf16.msra.mxu0 0
        %483 = vmatpush.bf16.msra.mxu0 0
        %484 = vmatpush.bf16.msra.mxu0 0
        %485 = vmatpush.bf16.msra.mxu0 %v472
        %486 = vmatpush.bf16.msra.mxu0 %v471
        %487 = vmatmul.bf16.gmra.mxu0 %v477
        %v488 = vpop.f32.mrf.mxu0
        %v489 = vadd.f32 0.0, %v488
        %v490 = vpop.f32.mrf.mxu0
        %v491 = vadd.f32 0.0, %v490
        %492 = vdwg.mxu0
        %v497 = vunpack.c.l.b16 %v420
        %v498 = vunpack.c.l.b16 %v421
        %v499 = vunpack.c.l.b16 %v422
        %v500 = vunpack.c.l.b16 %v423
        %v501 = vpack.c.b16 %v498, %v497
        %v502 = vpack.c.b16 %v500, %v499
        %v506 = vsel %vm475, %v437, 0
        %508 = vmatpush.bf16.msra.mxu0 0
        %509 = vmatpush.bf16.msra.mxu0 0
        %510 = vmatpush.bf16.msra.mxu0 0
        %511 = vmatpush.bf16.msra.mxu0 0
        %512 = vmatpush.bf16.msra.mxu0 0
        %513 = vmatpush.bf16.msra.mxu0 0
        %514 = vmatpush.bf16.msra.mxu0 %v502
        %515 = vmatpush.bf16.msra.mxu0 %v501
        %516 = vmatmul.bf16.gmra.mxu0 %v506
        %v517 = vpop.f32.mrf.mxu0
        %v518 = vadd.f32 %v489, %v517
        %v519 = vpop.f32.mrf.mxu0
        %v520 = vadd.f32 %v491, %v519
        %521 = vdwg.mxu0
        %522 = vmatpush.bf16.msra.mxu0 0
        %523 = vmatpush.bf16.msra.mxu0 0
        %524 = vmatpush.bf16.msra.mxu0 0
        %525 = vmatpush.bf16.msra.mxu0 0
        %526 = vmatpush.bf16.msra.mxu0 0
        %527 = vmatpush.bf16.msra.mxu0 0
        %528 = vmatpush.bf16.msra.mxu0 0
        %529 = vmatpush.bf16.msra.mxu0 %v462
        %530 = vmatmul.bf16.gmra.mxu0 %v441
        %v531 = vpop.f32.mrf.mxu0
        %v532 = vadd.f32 0.0, %v531
        %v533 = vpop.f32.mrf.mxu0
        %v534 = vadd.f32 0.0, %v533
        %535 = vdwg.mxu0
        %v536 = vmul.f32 %v532, 2.0
        %v537 = vmul.f32 %v534, 2.0
        %v538 = vsub.f32 %v536, %v424
        %v539 = vsub.f32 %v537, %v425
        %s540 = scalar_lea.vmem %s297, 32 [#allocation4]
        %v541 = vld [vmem:[%s540] sm:$0xf]
        %v542 = vld [vmem:[%s540 + $0x4] sm:$0xf]
        %v543 = vld [vmem:[%s540 + $0x8] sm:$0xf]
        %v544 = vld [vmem:[%s540 + $0xc] sm:$0xf]
        %v545 = vpack.c.bf16 %v539, %v538
        %v550 = vunpack.c.l.b16 %v541
        %v551 = vunpack.c.l.b16 %v542
        %v552 = vunpack.c.l.b16 %v543
        %v553 = vunpack.c.l.b16 %v544
        %v554 = vpack.c.b16 %v551, %v550
        %v555 = vpack.c.b16 %v553, %v552
        %v559 = vsel %vm475, %v545, 0
        %561 = vmatpush.bf16.msra.mxu0 0
        %562 = vmatpush.bf16.msra.mxu0 0
        %563 = vmatpush.bf16.msra.mxu0 0
        %564 = vmatpush.bf16.msra.mxu0 0
        %565 = vmatpush.bf16.msra.mxu0 0
        %566 = vmatpush.bf16.msra.mxu0 0
        %567 = vmatpush.bf16.msra.mxu0 %v555
        %568 = vmatpush.bf16.msra.mxu0 %v554
        %569 = vmatmul.bf16.gmra.mxu0 %v559
        %v570 = vpop.f32.mrf.mxu0
        %v571 = vadd.f32 0.0, %v570
        %v572 = vpop.f32.mrf.mxu0
        %v573 = vadd.f32 0.0, %v572
        %574 = vdwg.mxu0
        %v575 = vadd.f32 %v518, %v571
        %v576 = vadd.f32 %v520, %v573
        %s577 = scalar_lea.vmem %s2, 8
        %v578 = vld [vmem:[%s577] sm:$0xf]
        %v579 = vld [vmem:[%s577 + $0x4] sm:$0xf]
        %v582 = vunpack.c.l.b16 %v578
        %v583 = vunpack.c.l.b16 %v579
        %v584 = vpack.c.b16 %v583, %v582
        %v586 = vsel %vm439, %v584, 0
        %588 = vmatpush.bf16.msra.mxu0 0
        %589 = vmatpush.bf16.msra.mxu0 0
        %590 = vmatpush.bf16.msra.mxu0 0
        %591 = vmatpush.bf16.msra.mxu0 0
        %592 = vmatpush.bf16.msra.mxu0 0
        %593 = vmatpush.bf16.msra.mxu0 0
        %594 = vmatpush.bf16.msra.mxu0 0
        %595 = vmatpush.bf16.msra.mxu0 %v437
        %596 = vmatmul.bf16.gmra.mxu0 %v586
        %v597 = vpop.f32.mrf.mxu0
        %v598 = vadd.f32 0.0, %v597
        %v599 = vpop.f32.mrf.mxu0
        %v600 = vadd.f32 0.0, %v599
        %601 = vdwg.mxu0
        %s602 = scalar_lea.vmem %s297, 48 [#allocation4]
        %v603 = vld [vmem:[%s602] sm:$0xf]
        %v604 = vld [vmem:[%s602 + $0x4] sm:$0xf]
        %v605 = vld [vmem:[%s602 + $0x8] sm:$0xf]
        %v606 = vld [vmem:[%s602 + $0xc] sm:$0xf]
        %v607 = vpack.c.bf16 %v600, %v598
        %v612 = vunpack.c.l.b16 %v603
        %v613 = vunpack.c.l.b16 %v604
        %v614 = vunpack.c.l.b16 %v605
        %v615 = vunpack.c.l.b16 %v606
        %v616 = vpack.c.b16 %v613, %v612
        %v617 = vpack.c.b16 %v615, %v614
        %v621 = vsel %vm475, %v607, 0
        %623 = vmatpush.bf16.msra.mxu0 0
        %624 = vmatpush.bf16.msra.mxu0 0
        %625 = vmatpush.bf16.msra.mxu0 0
        %626 = vmatpush.bf16.msra.mxu0 0
        %627 = vmatpush.bf16.msra.mxu0 0
        %628 = vmatpush.bf16.msra.mxu0 0
        %629 = vmatpush.bf16.msra.mxu0 %v617
        %630 = vmatpush.bf16.msra.mxu0 %v616
        %631 = vmatmul.bf16.gmra.mxu0 %v621
        %v632 = vpop.f32.mrf.mxu0
        %v633 = vadd.f32 0.0, %v632
        %v634 = vpop.f32.mrf.mxu0
        %v635 = vadd.f32 0.0, %v634
        %636 = vdwg.mxu0
        %v637 = vadd.f32 %v575, %v633
        %v638 = vadd.f32 %v576, %v635
        %639 = vmatpush.bf16.msra.mxu0 0
        %640 = vmatpush.bf16.msra.mxu0 0
        %641 = vmatpush.bf16.msra.mxu0 0
        %642 = vmatpush.bf16.msra.mxu0 0
        %643 = vmatpush.bf16.msra.mxu0 0
        %644 = vmatpush.bf16.msra.mxu0 0
        %645 = vmatpush.bf16.msra.mxu0 0
        %646 = vmatpush.bf16.msra.mxu0 %v607
        %647 = vmatmul.bf16.gmra.mxu0 %v586
        %v648 = vpop.f32.mrf.mxu0
        %v649 = vadd.f32 0.0, %v648
        %v650 = vpop.f32.mrf.mxu0
        %v651 = vadd.f32 0.0, %v650
        %652 = vdwg.mxu0
        %v653 = vmul.f32 %v649, 2.0
        %v654 = vmul.f32 %v651, 2.0
        %v655 = vsub.f32 %v653, %v424
        %v656 = vsub.f32 %v654, %v425
        %s657 = scalar_lea.vmem %s297, 64 [#allocation4]
        %v658 = vld [vmem:[%s657] sm:$0xf]
        %v659 = vld [vmem:[%s657 + $0x4] sm:$0xf]
        %v660 = vld [vmem:[%s657 + $0x8] sm:$0xf]
        %v661 = vld [vmem:[%s657 + $0xc] sm:$0xf]
        %v662 = vpack.c.bf16 %v656, %v655
        %v667 = vunpack.c.l.b16 %v658
        %v668 = vunpack.c.l.b16 %v659
        %v669 = vunpack.c.l.b16 %v660
        %v670 = vunpack.c.l.b16 %v661
        %v671 = vpack.c.b16 %v668, %v667
        %v672 = vpack.c.b16 %v670, %v669
        %v676 = vsel %vm475, %v662, 0
        %678 = vmatpush.bf16.msra.mxu0 0
        %679 = vmatpush.bf16.msra.mxu0 0
        %680 = vmatpush.bf16.msra.mxu0 0
        %681 = vmatpush.bf16.msra.mxu0 0
        %682 = vmatpush.bf16.msra.mxu0 0
        %683 = vmatpush.bf16.msra.mxu0 0
        %684 = vmatpush.bf16.msra.mxu0 %v672
        %685 = vmatpush.bf16.msra.mxu0 %v671
        %686 = vmatmul.bf16.gmra.mxu0 %v676
        %v687 = vpop.f32.mrf.mxu0
        %v688 = vadd.f32 0.0, %v687
        %v689 = vpop.f32.mrf.mxu0
        %v690 = vadd.f32 0.0, %v689
        %691 = vdwg.mxu0
        %v692 = vadd.f32 %v637, %v688
        %v693 = vadd.f32 %v638, %v690
        %v694 = vld [vmem:[%s374] sm:$0x1]
        %v696 = vperm.slane %v694, 0
        %v698 = vadd.f32 %v692, %v696
        %v699 = vadd.f32 %v693, %v696
        %v700 = vxor.u32 %v698, 2147483648
        %v701 = vxor.u32 %v699, 2147483648
        %v702 = vmul.f32 %v700, 1.442695
        %v703 = vpow.pop %v702
        %v704 = vmul.f32 %v701, 1.442695
        %v705 = vpow.pop %v704
        %v706 = vadd.f32 %v703, 1.0
        %v707 = vadd.f32 %v705, 1.0
        %v708 = vrcp.pop %v706
        %v709 = vmul.f32 %v706, %v708
        %v710 = vsub.f32 1.0, %v709
        %v711 = vmul.f32 %v708, %v710
        %v712 = vadd.f32 %v708, %v711
        %vm713 = vweird.f32 %v706
        %vm714 = vweird.f32 %v708
        %vm715 = vmor %vm713, %vm714
        %v716 = vsel %vm715, %v708, %v712
        %v717 = vand.u32 2147483647, %v706
        %vm718 = vcmp.eq.f32.partialorder %v717, 8.507059e+37
        %v719 = vand.u32 %v706, 2147483648
        %v720 = vor.u32 1.1754944e-38, %v719
        %v721 = vsel %vm718, %v720, %v716
        %v722 = vmul.f32 1.0, %v721
        %v723 = vrcp.pop %v707
        %v724 = vmul.f32 %v707, %v723
        %v725 = vsub.f32 1.0, %v724
        %v726 = vmul.f32 %v723, %v725
        %v727 = vadd.f32 %v723, %v726
        %vm728 = vweird.f32 %v707
        %vm729 = vweird.f32 %v723
        %vm730 = vmor %vm728, %vm729
        %v731 = vsel %vm730, %v723, %v727
        %v732 = vand.u32 2147483647, %v707
        %vm733 = vcmp.eq.f32.partialorder %v732, 8.507059e+37
        %v734 = vand.u32 %v707, 2147483648
        %v735 = vor.u32 1.1754944e-38, %v734
        %v736 = vsel %vm733, %v735, %v731
        %v737 = vmul.f32 1.0, %v736
        %v738 = vmul.f32 %v722, %v385
        %v739 = vmul.f32 %v737, %v386
        %v740 = vld [vmem:[%s371] sm:$0xf]
        %v741 = vld [vmem:[%s371 + $0x4] sm:$0xf]
        %v742 = vpack.c.bf16 %v739, %v738
        %v745 = vunpack.c.l.b16 %v740
        %v746 = vunpack.c.l.b16 %v741
        %v747 = vpack.c.b16 %v746, %v745
        %v750 = vsel %vm439, %v742, 0
        %752 = vmatpush.bf16.msra.mxu0 0
        %753 = vmatpush.bf16.msra.mxu0 0
        %754 = vmatpush.bf16.msra.mxu0 0
        %755 = vmatpush.bf16.msra.mxu0 0
        %756 = vmatpush.bf16.msra.mxu0 0
        %757 = vmatpush.bf16.msra.mxu0 0
        %758 = vmatpush.bf16.msra.mxu0 0
        %759 = vmatpush.bf16.msra.mxu0 %v747
        %760 = vmatmul.bf16.gmra.mxu0 %v750
        %v761 = vpop.f32.mrf.mxu0
        %v762 = vadd.f32 0.0, %v761
        %v763 = vpop.f32.mrf.mxu0
        %v764 = vadd.f32 0.0, %v763
        %765 = vdwg.mxu0
        %768 = vrot.lane.b32.xlu0 %v762, 32
        %v769 = vpop.permute.xlu0 %768
        %770 = vrot.lane.b32.xlu0 %v764, 32
        %v771 = vpop.permute.xlu0 %770
        %v774 = vadd.f32 %v698, %v769
        %v775 = vadd.f32 %v699, %v771
        %776 = vmatpush.bf16.msra.mxu0 0
        %777 = vmatpush.bf16.msra.mxu0 0
        %778 = vmatpush.bf16.msra.mxu0 0
        %779 = vmatpush.bf16.msra.mxu0 0
        %780 = vmatpush.bf16.msra.mxu0 0
        %781 = vmatpush.bf16.msra.mxu0 0
        %782 = vmatpush.bf16.msra.mxu0 0
        %783 = vmatpush.bf16.msra.mxu0 %v742
        %784 = vmatmul.bf16.gmra.mxu0 %v441
        %v785 = vpop.f32.mrf.mxu0
        %v786 = vadd.f32 0.0, %v785
        %v787 = vpop.f32.mrf.mxu0
        %v788 = vadd.f32 0.0, %v787
        %789 = vdwg.mxu0
        %s790 = scalar_lea.vmem %s371, 8
        %v791 = vld [vmem:[%s790] sm:$0xf]
        %v792 = vld [vmem:[%s790 + $0x4] sm:$0xf]
        %v793 = vpack.c.bf16 %v788, %v786
        %v796 = vunpack.c.l.b16 %v791
        %v797 = vunpack.c.l.b16 %v792
        %v798 = vpack.c.b16 %v797, %v796
        %v801 = vsel %vm439, %v793, 0
        %803 = vmatpush.bf16.msra.mxu0 0
        %804 = vmatpush.bf16.msra.mxu0 0
        %805 = vmatpush.bf16.msra.mxu0 0
        %806 = vmatpush.bf16.msra.mxu0 0
        %807 = vmatpush.bf16.msra.mxu0 0
        %808 = vmatpush.bf16.msra.mxu0 0
        %809 = vmatpush.bf16.msra.mxu0 0
        %810 = vmatpush.bf16.msra.mxu0 %v798
        %811 = vmatmul.bf16.gmra.mxu0 %v801
        %v812 = vpop.f32.mrf.mxu0
        %v813 = vadd.f32 0.0, %v812
        %v814 = vpop.f32.mrf.mxu0
        %v815 = vadd.f32 0.0, %v814
        %816 = vdwg.mxu0
        %819 = vrot.lane.b32.xlu0 %v813, 32
        %v820 = vpop.permute.xlu0 %819
        %821 = vrot.lane.b32.xlu0 %v815, 32
        %v822 = vpop.permute.xlu0 %821
        %v825 = vadd.f32 %v774, %v820
        %v826 = vadd.f32 %v775, %v822
        %827 = vmatpush.bf16.msra.mxu0 0
        %828 = vmatpush.bf16.msra.mxu0 0
        %829 = vmatpush.bf16.msra.mxu0 0
        %830 = vmatpush.bf16.msra.mxu0 0
        %831 = vmatpush.bf16.msra.mxu0 0
        %832 = vmatpush.bf16.msra.mxu0 0
        %833 = vmatpush.bf16.msra.mxu0 0
        %834 = vmatpush.bf16.msra.mxu0 %v793
        %835 = vmatmul.bf16.gmra.mxu0 %v441
        %v836 = vpop.f32.mrf.mxu0
        %v837 = vadd.f32 0.0, %v836
        %v838 = vpop.f32.mrf.mxu0
        %v839 = vadd.f32 0.0, %v838
        %840 = vdwg.mxu0
        %v841 = vmul.f32 %v837, 2.0
        %v842 = vmul.f32 %v839, 2.0
        %v843 = vsub.f32 %v841, %v738
        %v844 = vsub.f32 %v842, %v739
        %s845 = scalar_lea.vmem %s371, 16
        %v846 = vld [vmem:[%s845] sm:$0xf]
        %v847 = vld [vmem:[%s845 + $0x4] sm:$0xf]
        %v848 = vpack.c.bf16 %v844, %v843
        %v851 = vunpack.c.l.b16 %v846
        %v852 = vunpack.c.l.b16 %v847
        %v853 = vpack.c.b16 %v852, %v851
        %v856 = vsel %vm439, %v848, 0
        %858 = vmatpush.bf16.msra.mxu0 0
        %859 = vmatpush.bf16.msra.mxu0 0
        %860 = vmatpush.bf16.msra.mxu0 0
        %861 = vmatpush.bf16.msra.mxu0 0
        %862 = vmatpush.bf16.msra.mxu0 0
        %863 = vmatpush.bf16.msra.mxu0 0
        %864 = vmatpush.bf16.msra.mxu0 0
        %865 = vmatpush.bf16.msra.mxu0 %v853
        %866 = vmatmul.bf16.gmra.mxu0 %v856
        %v867 = vpop.f32.mrf.mxu0
        %v868 = vadd.f32 0.0, %v867
        %v869 = vpop.f32.mrf.mxu0
        %v870 = vadd.f32 0.0, %v869
        %871 = vdwg.mxu0
        %874 = vrot.lane.b32.xlu0 %v868, 32
        %v875 = vpop.permute.xlu0 %874
        %876 = vrot.lane.b32.xlu0 %v870, 32
        %v877 = vpop.permute.xlu0 %876
        %v880 = vadd.f32 %v825, %v875
        %v881 = vadd.f32 %v826, %v877
        %882 = vmatpush.bf16.msra.mxu0 0
        %883 = vmatpush.bf16.msra.mxu0 0
        %884 = vmatpush.bf16.msra.mxu0 0
        %885 = vmatpush.bf16.msra.mxu0 0
        %886 = vmatpush.bf16.msra.mxu0 0
        %887 = vmatpush.bf16.msra.mxu0 0
        %888 = vmatpush.bf16.msra.mxu0 0
        %889 = vmatpush.bf16.msra.mxu0 %v742
        %890 = vmatmul.bf16.gmra.mxu0 %v586
        %v891 = vpop.f32.mrf.mxu0
        %v892 = vadd.f32 0.0, %v891
        %v893 = vpop.f32.mrf.mxu0
        %v894 = vadd.f32 0.0, %v893
        %895 = vdwg.mxu0
        %s896 = scalar_lea.vmem %s371, 24
        %v897 = vld [vmem:[%s896] sm:$0xf]
        %v898 = vld [vmem:[%s896 + $0x4] sm:$0xf]
        %v899 = vpack.c.bf16 %v894, %v892
        %v902 = vunpack.c.l.b16 %v897
        %v903 = vunpack.c.l.b16 %v898
        %v904 = vpack.c.b16 %v903, %v902
        %v907 = vsel %vm439, %v899, 0
        %909 = vmatpush.bf16.msra.mxu0 0
        %910 = vmatpush.bf16.msra.mxu0 0
        %911 = vmatpush.bf16.msra.mxu0 0
        %912 = vmatpush.bf16.msra.mxu0 0
        %913 = vmatpush.bf16.msra.mxu0 0
        %914 = vmatpush.bf16.msra.mxu0 0
        %915 = vmatpush.bf16.msra.mxu0 0
        %916 = vmatpush.bf16.msra.mxu0 %v904
        %917 = vmatmul.bf16.gmra.mxu0 %v907
        %v918 = vpop.f32.mrf.mxu0
        %v919 = vadd.f32 0.0, %v918
        %v920 = vpop.f32.mrf.mxu0
        %v921 = vadd.f32 0.0, %v920
        %922 = vdwg.mxu0
        %925 = vrot.lane.b32.xlu0 %v919, 32
        %v926 = vpop.permute.xlu0 %925
        %927 = vrot.lane.b32.xlu0 %v921, 32
        %v928 = vpop.permute.xlu0 %927
        %v931 = vadd.f32 %v880, %v926
        %v932 = vadd.f32 %v881, %v928
        %933 = vmatpush.bf16.msra.mxu0 0
        %934 = vmatpush.bf16.msra.mxu0 0
        %935 = vmatpush.bf16.msra.mxu0 0
        %936 = vmatpush.bf16.msra.mxu0 0
        %937 = vmatpush.bf16.msra.mxu0 0
        %938 = vmatpush.bf16.msra.mxu0 0
        %939 = vmatpush.bf16.msra.mxu0 0
        %940 = vmatpush.bf16.msra.mxu0 %v899
        %941 = vmatmul.bf16.gmra.mxu0 %v586
        %v942 = vpop.f32.mrf.mxu0
        %v943 = vadd.f32 0.0, %v942
        %v944 = vpop.f32.mrf.mxu0
        %v945 = vadd.f32 0.0, %v944
        %946 = vdwg.mxu0
        %v947 = vmul.f32 %v943, 2.0
        %v948 = vmul.f32 %v945, 2.0
        %v949 = vsub.f32 %v947, %v738
        %v950 = vsub.f32 %v948, %v739
        %s951 = scalar_lea.vmem %s371, 32
        %v952 = vld [vmem:[%s951] sm:$0xf]
        %v953 = vld [vmem:[%s951 + $0x4] sm:$0xf]
        %v954 = vpack.c.bf16 %v950, %v949
        %v957 = vunpack.c.l.b16 %v952
        %v958 = vunpack.c.l.b16 %v953
        %v959 = vpack.c.b16 %v958, %v957
        %v962 = vsel %vm439, %v954, 0
        %964 = vmatpush.bf16.msra.mxu0 0
        %965 = vmatpush.bf16.msra.mxu0 0
        %966 = vmatpush.bf16.msra.mxu0 0
        %967 = vmatpush.bf16.msra.mxu0 0
        %968 = vmatpush.bf16.msra.mxu0 0
        %969 = vmatpush.bf16.msra.mxu0 0
        %970 = vmatpush.bf16.msra.mxu0 0
        %971 = vmatpush.bf16.msra.mxu0 %v959
        %972 = vmatmul.bf16.gmra.mxu0 %v962
        %v973 = vpop.f32.mrf.mxu0
        %v974 = vadd.f32 0.0, %v973
        %v975 = vpop.f32.mrf.mxu0
        %v976 = vadd.f32 0.0, %v975
        %977 = vdwg.mxu0
        %980 = vrot.lane.b32.xlu0 %v974, 32
        %v981 = vpop.permute.xlu0 %980
        %982 = vrot.lane.b32.xlu0 %v976, 32
        %v983 = vpop.permute.xlu0 %982
        %v986 = vadd.f32 %v931, %v981
        %v987 = vadd.f32 %v932, %v983
        %v988 = vtanh.pop %v986
        %v989 = vtanh.pop %v987
        %992 = vrot.lane.b32.xlu0 %v385, 16
        %v993 = vpop.permute.xlu0 %992
        %994 = vrot.lane.b32.xlu0 %v386, 16
        %v995 = vpop.permute.xlu0 %994
        %v998 = vmul.f32 %v722, %v993
        %v999 = vmul.f32 %v737, %v995
        %v1000 = vsub.f32 1.0, %v722
        %v1001 = vsub.f32 1.0, %v737
        %1004 = vrot.lane.b32.xlu0 %v988, 112
        %v1005 = vpop.permute.xlu0 %1004
        %1006 = vrot.lane.b32.xlu0 %v989, 112
        %v1007 = vpop.permute.xlu0 %1006
        %v1010 = vmul.f32 %v1000, %v1005
        %v1011 = vmul.f32 %v1001, %v1007
        %v1012 = vadd.f32 %v998, %v1010
        %v1013 = vadd.f32 %v999, %v1011
        %1016 = vrot.lane.b32.xlu0 %v1012, 112
        %v1017 = vpop.permute.xlu0 %1016
        %1018 = vrot.lane.b32.xlu0 %v1013, 112
        %v1019 = vpop.permute.xlu0 %1018
        %1022 = vst.msk [vmem:[%s383] sm:$0xff] %vm439, %v1017
        %1023 = vst.msk [vmem:[%s383 + $0x8] sm:$0xff] %vm439, %v1019
        %v1024 = vpack.c.bf16 %v1012, %v1012
        %v1025 = vpack.c.bf16 %v1013, %v1013
        %1028 = vrot.lane.b32.xlu0 %v1024, 112
        %v1029 = vpop.permute.xlu0 %1028
        %1030 = vrot.lane.b32.xlu0 %v1025, 112
        %v1031 = vpop.permute.xlu0 %1030
        %vm1034 = vcmask 125952
        %1035 = vst.msk [vmem:[#allocation3] sm:$0xf] %vm1034, %v1029
        %1036 = vst.msk [vmem:[#allocation3 + $0x4] sm:$0xf] %vm1034, %v1031
        %p1037 = scmp.lt.s32.totalorder %s25, 1
        %s1038 = scalar_select %p1037, %s25, 1
        %p1039 = scmp.lt.s32.totalorder %s24, 1
        %s1040 = scalar_select %p1039, %s24, 1
        %s1041 = smul.addr %s1040, 2
        %s1042 = smul.addr %s1038, 4
        %s1043 = sadd.s32 %s1041, %s1042
        %s1044 = smul.addr %s1043, 8
        %s1045 = scalar_lea.vmem %s6, %s1044
        // Predicated region
        $region57: #{forward.1} parent=43 // pred_check
          %p1046 = pneg %p205
        $region58: #{forward.1} parent=43 // pred_check_branch
          %1048 = sbr.rel (%p1046) target = $region60
        $region59: #{forward.1} parent=43 // pred_region
          _
        $region60: #{forward.1} parent=43 // pred_fallthru
          _
      $region44: #{forward.1} parent=5 // pred_fallthru
        _
      %p1049 = scmp.le.s32.totalorder 2, %s15
      // Predicated region
      $region61: #{forward.1} parent=5 // pred_check
        %p1050 = pneg %p1049
      $region62: #{forward.1} parent=5 // pred_check_branch
        %1052 = sbr.rel (%p1050) target = $region64
      $region63: #{forward.1} parent=5 // pred_region
        %s1053 = ssub.s32 %s15, 2
        // Predicated region
        $region65: #{forward.1} parent=63 // pred_check
          %p1054 = pneg %p211
        $region66: #{forward.1} parent=63 // pred_check_branch
          %1056 = sbr.rel (%p1054) target = $region68
        $region67: #{forward.1} parent=63 // pred_region
          %p1057 = scmp.lt.s32.totalorder %s27, 1
          %s1058 = scalar_select %p1057, %s27, 1
          %p1059 = scmp.lt.s32.totalorder %s26, 1
          %s1060 = scalar_select %p1059, %s26, 1
          %s1061 = smul.addr %s1060, 2
          %s1062 = smul.addr %s1058, 4
          %s1063 = sadd.s32 %s1061, %s1062
          %s1064 = smul.addr %s1063, 8
          %s1065 = scalar_lea.vmem %s6, %s1064
        $region68: #{forward.1} parent=63 // pred_fallthru
          _
      $region64: #{forward.1} parent=5 // pred_fallthru
        _
    $region6: #{forward.1} parent=1 // loop_footer
      %s19 = sadd.s32 1, %s15
    $region7: #{forward.1} parent=1 // loop_footer_branch
      %14 = sbr.rel target = $region3
    $region8: #{forward.1} parent=1 // loop_exit
      _
    %1066 = vsyncpa [#allocation5], 1
    %s1067 = scalar_lea.sflag [#allocation5], 1
    %1068 = vsyncpa %s1067, 1

</llo_original>
